<compile_context>
chip_gen: v7x
topology: tpu7x:2x2x1
jax: 0.10.0
libtpu: 0.0.40
codegen_flags: <defaults>
</compile_context>

<pallas_src>
import functools

import jax
import jax.numpy as jnp
from jax import lax
from jax.experimental import pallas as pl
from jax.experimental.pallas import tpu as pltpu

_EPS = 1e-12  # matches torch.nn.functional.normalize eps


def _row_l2_normalize(x, scale=1.0):
    """Row-wise L2 normalize a (R, D) f32 tile, optionally folding in a scale."""
    sumsq = jnp.sum(x * x, axis=1, keepdims=True)
    inv = scale / jnp.maximum(jnp.sqrt(sumsq), _EPS)
    return x * inv


def _pick_row_tile(n, max_tile=256):
    """Largest power-of-two row tile (multiple of 8) dividing n, else the full n."""
    for t in (256, 128, 64, 32, 16, 8):
        if t <= max_tile and n % t == 0:
            return t
    return n  # full extent (allowed by BlockSpec even if not a multiple of 8)


# ----------------------------------------------------------------------------
# Pre-pass: L2-normalize key rows once (reused by every query row tile).
# ----------------------------------------------------------------------------
def _l2norm_kernel(x_ref, o_ref):
    o_ref[...] = _row_l2_normalize(x_ref[...].astype(jnp.float32))


def _l2_normalize_rows(x):
    R, D = x.shape
    t = _pick_row_tile(R)
    return pl.pallas_call(
        _l2norm_kernel,
        out_shape=jax.ShapeDtypeStruct((R, D), jnp.float32),
        grid=(R // t,),
        in_specs=[pl.BlockSpec((t, D), lambda i: (i, 0))],
        out_specs=pl.BlockSpec((t, D), lambda i: (i, 0)),
        compiler_params=pltpu.CompilerParams(dimension_semantics=("parallel",)),
    )(x.astype(jnp.float32))


# ----------------------------------------------------------------------------
# Path 1: negative_keys is None -> keys are the other samples' positives,
# labels = arange(B). Per-row loss = logsumexp(sim_row) - sim[i, i].
# ----------------------------------------------------------------------------
def _infonce_self_kernel(q_ref, k_ref, loss_ref, *, inv_temp, matmul_dtype):
    # q_ref: (TQ, D) raw query rows; k_ref: (B, D) pre-normalized keys; loss_ref: (TQ, 1)
    q = _row_l2_normalize(q_ref[...].astype(jnp.float32), scale=inv_temp)  # 1/T folded here
    k = k_ref[...]
    # (TQ, B) logits; both contracting dims on the lane axis -> no materialized k.T
    sim = lax.dot_general(
        q.astype(matmul_dtype), k.astype(matmul_dtype),
        dimension_numbers=(((1,), (1,)), ((), ())),
        preferred_element_type=jnp.float32)
    tq, nk = sim.shape

    m = jnp.max(sim, axis=1, keepdims=True)                       # includes the positive
    denom = jnp.sum(jnp.exp(sim - m), axis=1, keepdims=True)      # (TQ, 1)

    # positive logit = "diagonal" of the global BxB matrix, offset by this row tile
    cols = lax.broadcasted_iota(jnp.int32, (tq, nk), 1)
    rows = lax.broadcasted_iota(jnp.int32, (tq, nk), 0) + pl.program_id(0) * tq
    pos = jnp.sum(jnp.where(cols == rows, sim, 0.0), axis=1, keepdims=True)

    loss_ref[...] = m + jnp.log(denom) - pos


# ----------------------------------------------------------------------------
# Path 2: unpaired negatives -> logits_row = [pos_logit, q @ negatives.T], label 0.
# Per-row loss = logsumexp([pos, negs]) - pos.
# ----------------------------------------------------------------------------
def _infonce_neg_kernel(q_ref, p_ref, n_ref, loss_ref, *, inv_temp, matmul_dtype):
    # q_ref, p_ref: (TQ, D); n_ref: (M, D) pre-normalized negatives; loss_ref: (TQ, 1)
    q = _row_l2_normalize(q_ref[...].astype(jnp.float32), scale=inv_temp)  # 1/T folded
    p = p_ref[...]
    n = n_ref[...]

    pos = jnp.sum(q * p, axis=1, keepdims=True)                   # (TQ, 1), already / T
    neg = lax.dot_general(
        q.astype(matmul_dtype), n.astype(matmul_dtype),
        dimension_numbers=(((1,), (1,)), ((), ())),
        preferred_element_type=jnp.float32)                       # (TQ, M)

    m = jnp.maximum(pos, jnp.max(neg, axis=1, keepdims=True))
    denom = jnp.exp(pos - m) + jnp.sum(jnp.exp(neg - m), axis=1, keepdims=True)
    loss_ref[...] = m + jnp.log(denom) - pos


# ----------------------------------------------------------------------------
# Wrapper mirroring InfoNCE.forward / info_nce.
# ----------------------------------------------------------------------------
def info_nce_pallas(query, positive_key, negative_keys=None, *,
                    temperature=0.1, reduction="mean", negative_mode="unpaired",
                    matmul_dtype=jnp.float32):
    if query.ndim != 2:
        raise ValueError("<query> must have 2 dimensions.")
    if positive_key.ndim != 2:
        raise ValueError("<positive_key> must have 2 dimensions.")
    if query.shape[0] != positive_key.shape[0]:
        raise ValueError("<query> and <positive_key> must have the same number of samples.")
    if query.shape[-1] != positive_key.shape[-1]:
        raise ValueError("<query> and <positive_key> must have the same embedding size.")
    if negative_keys is not None and negative_mode != "unpaired":
        # TODO(synk): negative_mode='paired' ((N, M, D) negatives) not implemented in Pallas.
        raise NotImplementedError("Only negative_mode='unpaired' (or no negatives) is supported.")

    B, D = query.shape
    inv_temp = 1.0 / float(temperature)
    tq = _pick_row_tile(B)
    params = pltpu.CompilerParams(dimension_semantics=("parallel",))
    q32 = query.astype(jnp.float32)

    if negative_keys is None:
        keys = _l2_normalize_rows(positive_key)          # normalized once, reused per tile
        per_row = pl.pallas_call(
            functools.partial(_infonce_self_kernel,
                              inv_temp=inv_temp, matmul_dtype=matmul_dtype),
            out_shape=jax.ShapeDtypeStruct((B, 1), jnp.float32),
            grid=(B // tq,),
            in_specs=[pl.BlockSpec((tq, D), lambda i: (i, 0)),   # query row tile
                      pl.BlockSpec((B, D), lambda i: (0, 0))],   # all keys (resident)
            out_specs=pl.BlockSpec((tq, 1), lambda i: (i, 0)),
            compiler_params=params,
        )(q32, keys)
    else:
        if negative_keys.ndim != 2:
            raise ValueError("<negative_keys> must have 2 dimensions if negative_mode == 'unpaired'.")
        if query.shape[-1] != negative_keys.shape[-1]:
            raise ValueError("<query> and <negative_keys> must have the same embedding size.")
        M = negative_keys.shape[0]
        p_n = _l2_normalize_rows(positive_key)
        n_n = _l2_normalize_rows(negative_keys)
        per_row = pl.pallas_call(
            functools.partial(_infonce_neg_kernel,
                              inv_temp=inv_temp, matmul_dtype=matmul_dtype),
            out_shape=jax.ShapeDtypeStruct((B, 1), jnp.float32),
            grid=(B // tq,),
            in_specs=[pl.BlockSpec((tq, D), lambda i: (i, 0)),   # query row tile
                      pl.BlockSpec((tq, D), lambda i: (i, 0)),   # matching positive rows
                      pl.BlockSpec((M, D), lambda i: (0, 0))],   # all negatives (resident)
            out_specs=pl.BlockSpec((tq, 1), lambda i: (i, 0)),
            compiler_params=params,
        )(q32, p_n, n_n)

    per_row = per_row[:, 0]
    if reduction == "mean":
        return jnp.mean(per_row)
    if reduction == "sum":
        return jnp.sum(per_row)
    return per_row  # 'none'


# ----------------------------------------------------------------------------
# Pure-JAX reference mirroring the PyTorch forward.
# ----------------------------------------------------------------------------
def _l2norm_ref(x):
    n = jnp.linalg.norm(x, axis=-1, keepdims=True)
    return x / jnp.maximum(n, _EPS)


def info_nce_ref(query, positive_key, negative_keys=None, *,
                 temperature=0.1, reduction="mean"):
    q = _l2norm_ref(query.astype(jnp.float32))
    p = _l2norm_ref(positive_key.astype(jnp.float32))
    if negative_keys is None:
        logits = q @ p.T
        labels = jnp.arange(q.shape[0])
    else:
        n = _l2norm_ref(negative_keys.astype(jnp.float32))
        pos = jnp.sum(q * p, axis=1, keepdims=True)
        neg = q @ n.T
        logits = jnp.concatenate([pos, neg], axis=1)
        labels = jnp.zeros(q.shape[0], dtype=jnp.int32)
    logits = logits / temperature
    logp = jax.nn.log_softmax(logits, axis=-1)
    nll = -jnp.take_along_axis(logp, labels[:, None], axis=1)[:, 0]
    if reduction == "mean":
        return jnp.mean(nll)
    if reduction == "sum":
        return jnp.sum(nll)
    return nll


if __name__ == "__main__":
    key = jax.random.PRNGKey(0)
    kq, kp, kn = jax.random.split(key, 3)
    B, M, D = 8, 16, 32  # batch, num_negatives, embedding size
    query = jax.random.normal(kq, (B, D), dtype=jnp.float32)
    positive = jax.random.normal(kp, (B, D), dtype=jnp.float32)
    negatives = jax.random.normal(kn, (M, D), dtype=jnp.float32)

    # Path 1: no explicit negatives (other samples' positives are the negatives).
    l1 = jax.block_until_ready(info_nce_pallas(query, positive, temperature=0.1))
    r1 = jax.block_until_ready(info_nce_ref(query, positive, temperature=0.1))
    assert jnp.allclose(l1, r1, rtol=1e-4, atol=1e-4), (l1, r1)

    # Path 2: unpaired negative keys (docstring example).
    l2 = jax.block_until_ready(info_nce_pallas(query, positive, negatives, temperature=0.1))
    r2 = jax.block_until_ready(info_nce_ref(query, positive, negatives, temperature=0.1))
    assert jnp.allclose(l2, r2, rtol=1e-4, atol=1e-4), (l2, r2)

    print("KERNEL_OK")
</pallas_src>

<mosaic_0001>
module attributes {stable_mosaic.version = 11 : i64} {
  func.func @_l2norm_kernel(%arg0: i32, %arg1: memref<8x32xf32, #tpu.memory_space<vmem>>, %arg2: memref<8x32xf32, #tpu.memory_space<vmem>>) attributes {dimension_semantics = [#tpu.dimension_semantics<parallel>], iteration_bounds = array<i64: 1>, scalar_prefetch = 0 : i64, scratch_operands = 0 : i64, tpu.core_type = #tpu.core_type<tc>, window_params = [{transform_indices = @transform_0, window_bounds = array<i64: 8, 32>}, {transform_indices = @transform_1, window_bounds = array<i64: 8, 32>}]} {
    %c0 = arith.constant 0 : index
    %c0_0 = arith.constant 0 : index
    %0 = vector.load %arg1[%c0, %c0_0] : memref<8x32xf32, #tpu.memory_space<vmem>>, vector<8x32xf32>
    %1 = arith.mulf %0, %0 : vector<8x32xf32>
    %cst = arith.constant dense<0.000000e+00> : vector<8xf32>
    %2 = vector.multi_reduction <add>, %1, %cst [1] : vector<8x32xf32> to vector<8xf32>
    %3 = vector.shape_cast %2 : vector<8xf32> to vector<8x1xf32>
    %4 = math.sqrt %3 : vector<8x1xf32>
    %cst_1 = arith.constant 9.99999996E-13 : f32
    %5 = vector.broadcast %cst_1 : f32 to vector<8x1xf32>
    %6 = arith.maximumf %4, %5 : vector<8x1xf32>
    %cst_2 = arith.constant 1.000000e+00 : f32
    %7 = vector.broadcast %cst_2 : f32 to vector<8x1xf32>
    %8 = arith.divf %7, %6 : vector<8x1xf32>
    %9 = vector.broadcast %8 : vector<8x1xf32> to vector<8x32xf32>
    %10 = arith.mulf %0, %9 : vector<8x32xf32>
    %c0_3 = arith.constant 0 : index
    %c0_4 = arith.constant 0 : index
    %11 = vector.load %arg2[%c0_3, %c0_4] : memref<8x32xf32, #tpu.memory_space<vmem>>, vector<8x32xf32>
    tpu.vector_store %arg2[%c0_3, %c0_4], %10 {strides = array<i32>} : memref<8x32xf32, #tpu.memory_space<vmem>>, vector<8x32xf32>,
    return
  }
  func.func @transform_0(%arg0: i32) -> (i32, i32) {
    %c0_i32 = arith.constant 0 : i32
    %c0_i32_0 = arith.constant 0 : i32
    return %arg0, %c0_i32 : i32, i32
  }
  func.func @transform_1(%arg0: i32) -> (i32, i32) {
    %c0_i32 = arith.constant 0 : i32
    %c0_i32_0 = arith.constant 0 : i32
    return %arg0, %c0_i32 : i32, i32
  }
}

</mosaic_0001>

<llo_original>
// kernel: tpu_custom_call.1
$region0: #{tpu_custom_call.1}
  #allocation0 [shape = 'u32[]', space=smem, size = 0x4, offset = 0x4, fixed_abs, tag = 'smem constant byte address 0x4 - core index']
  #allocation1 [shape = 'u32[144,128]{1,0:T(1,128)}', space=vmem, size = 0x12000, scoped, tag = 'internal scratch']
  %s0 = inlined_call_operand.hbm [shape: f32[8,32], index: 0, kind: input, shape index: {}]
  %s1 = inlined_call_operand.hbm [shape: f32[8,32], index: 1, kind: output, shape index: {}]
  %s2 = sld [smem:[#allocation0]]
  $region18: #{tpu_custom_call.1} parent=0
    _
  %s4 = ssub.s32 1, %s2
  %s5 = scalar_select 0, %s4, %s2
  $region1: #{tpu_custom_call.1} parent=0
    #allocation2 [shape = 'u8[4096]{0}', space=vmem, size = 0x1000, scoped, tag = 'input window, operand 0, single buffered']
    #allocation3 [shape = 's32[1]{0}', space=sflag, size = 0x4, scoped, tag = 'scoped memory for tpu_custom_call.1']
    #allocation4 [shape = 's32[1]{0}', space=sflag, size = 0x4, scoped, tag = 'scoped memory for tpu_custom_call.1']
    #allocation5 [shape = 'u8[4096]{0}', space=vmem, size = 0x1000, scoped, tag = 'output window, operand 0, single buffered']
    %6 = vsyncpa [#allocation3], 0
    %7 = vsyncpa [#allocation4], 0
    // Predicated region
    $region2: #{tpu_custom_call.1} parent=1 // pred_check
      _
    $region3: #{tpu_custom_call.1} parent=1 // pred_check_branch
      %9 = sbr.rel (0) target = $region5
    $region4: #{tpu_custom_call.1} parent=1 // pred_region
      %s11 = ssub.s32 128, 128
      %12 = vsyncadd [#allocation3], %s11
      %s14 = sshll.u32 [#allocation2], 4
      %s15 = int_to_ptr.vmem [resolvable:$true] %s14
      %17 = dma.hbm_to_vmem [thread:$0]  %s0, 128, %s15, [#allocation3]
    $region5: #{tpu_custom_call.1} parent=1 // pred_fallthru
      _
    // Predicated region
    $region6: #{tpu_custom_call.1} parent=1 // pred_check
      _
    $region7: #{tpu_custom_call.1} parent=1 // pred_check_branch
      %19 = sbr.rel (0) target = $region9
    $region8: #{tpu_custom_call.1} parent=1 // pred_region
      %20 = dma.done [#allocation3], 128
    $region9: #{tpu_custom_call.1} parent=1 // pred_fallthru
      _
    %v21 = vld [vmem:[#allocation2] sm:$0xff]
    %v22 = vmul.f32 %v21, %v21
    %vm23 = vcmask 261120
    %v24 = vsel %vm23, %v22, 0.0
    %25 = vadd.xlane.f32.xlu0 %v24
    %v26 = vpop.xlane.xlu0 %25
    %v27 = vrsqrt.pop %v26
    %v28 = vmul.f32 %v26, %v27
    %vm29 = vcmp.eq.f32.partialorder %v26, inf
    %v30 = vsel %vm29, %v26, %v28
    %vm31 = vcmp.eq.f32.partialorder %v26, 0.0
    %v32 = vand.u32 %v26, 2147483648
    %v33 = vsel %vm31, %v32, %v30
    %v34 = vmax.f32 %v33, 1e-12
    %v35 = vrcp.pop %v34
    %v36 = vmul.f32 1.0, %v35
    %v37 = vmul.f32 %v21, %v36
    %38 = vst.msk [vmem:[#allocation5] sm:$0xff] %vm23, %v37
    // Predicated region
    $region10: #{tpu_custom_call.1} parent=1 // pred_check
      _
    $region11: #{tpu_custom_call.1} parent=1 // pred_check_branch
      %40 = sbr.rel (0) target = $region13
    $region12: #{tpu_custom_call.1} parent=1 // pred_region
      %s42 = ssub.s32 128, 128
      %43 = vsyncadd [#allocation4], %s42
      %s45 = sshll.u32 [#allocation5], 4
      %s46 = int_to_ptr.vmem [resolvable:$true] %s45
      %48 = dma.vmem_to_hbm [thread:$0]  %s46, 128, %s1, [#allocation4]
    $region13: #{tpu_custom_call.1} parent=1 // pred_fallthru
      _
    // Predicated region
    $region14: #{tpu_custom_call.1} parent=1 // pred_check
      _
    $region15: #{tpu_custom_call.1} parent=1 // pred_check_branch
      %50 = sbr.rel (0) target = $region17
    $region16: #{tpu_custom_call.1} parent=1 // pred_region
      %51 = dma.done [#allocation4], 128
    $region17: #{tpu_custom_call.1} parent=1 // pred_fallthru
      _
    %52 = vsyncpa [#allocation3], 1
    %53 = vsyncpa [#allocation4], 1

</llo_original>
